<compile_context>
chip_gen: v7x
topology: tpu7x:2x2x1
jax: 0.10.0
libtpu: 0.0.40
codegen_flags: <defaults>
</compile_context>

<pallas_src>
import jax
import jax.numpy as jnp
from jax.experimental import pallas as pl
from jax.experimental.pallas import tpu as pltpu


def _se_kernel(x_ref, w1_ref, b1_ref, w2t_ref, b2_ref, o_ref):
    # x_ref:   (HW, C)  one batch element; spatial on sublanes, channels on lanes
    # w1_ref:  (Cr, C)  squeeze 1x1-conv weight, original Conv2d (out, in) layout
    # b1_ref:  (Cr, 1)
    # w2t_ref: (Cr, C)  excite 1x1-conv weight, transposed so the Cr contraction
    #                   sits on sublanes and the C output sits on lanes
    # b2_ref:  (1, C)
    # o_ref:   (HW, C)
    x = x_ref[...].astype(jnp.float32)                   # (HW, C), f32 compute

    # AdaptiveAvgPool2d(1): global average over spatial (sublane reduce) -> (1, C)
    pooled = jnp.mean(x, axis=0, keepdims=True)

    # Conv2d(C, C//r, 1) on a 1x1 map == dense layer.  Done on the VPU:
    # broadcast pooled over the Cr sublanes of w1, reduce over the C lanes.
    h = jnp.sum(w1_ref[...] * pooled, axis=1, keepdims=True) + b1_ref[...]  # (Cr, 1)
    h = jnp.maximum(h, 0.0)                                                 # ReLU

    # Conv2d(C//r, C, 1) == dense layer.  Broadcast h over the C lanes of w2t,
    # reduce over the Cr sublanes.
    s = jnp.sum(w2t_ref[...] * h, axis=0, keepdims=True) + b2_ref[...]      # (1, C)
    s = jax.nn.sigmoid(s)

    # x * se: broadcast the per-channel gate over all spatial rows; store in the
    # I/O dtype (bf16 I/O halves HBM traffic, math stayed in f32).
    o_ref[...] = (x * s).astype(o_ref.dtype)


def squeeze_and_excite(x, w1, b1, w2, b2, *, vmem_limit_bytes=None):
    """SE forward.

    x:  (N, C, H, W), any float dtype (f32 / bf16).
    w1: (Cr, C, 1, 1), b1: (Cr,)   -- squeeze conv (C -> C//ratio)
    w2: (C, Cr, 1, 1), b2: (C,)    -- excite conv (C//ratio -> C)
    """
    N, C, H, W = x.shape
    Cr = w1.shape[0]
    HW = H * W

    # Channels-last per-batch tiles (layout plumbing only; in a real network the
    # surrounding layers would already be channels-last).
    x_hwc = jnp.transpose(x.reshape(N, C, HW), (0, 2, 1))       # (N, HW, C)

    w1_f = w1.reshape(Cr, C).astype(jnp.float32)                # (Cr, C)
    w2t = w2.reshape(C, Cr).T.astype(jnp.float32)               # (Cr, C)
    b1_r = b1.reshape(Cr, 1).astype(jnp.float32)
    b2_r = b2.reshape(1, C).astype(jnp.float32)

    itemsize = jnp.dtype(x.dtype).itemsize
    block_bytes = HW * C * itemsize
    weight_bytes = (2 * Cr * C + Cr + C) * 4
    if vmem_limit_bytes is None:
        # double-buffered input + output blocks, weights, and some headroom;
        # raised above the 16 MiB v5e scoped default, capped at 64 MiB so it is
        # also safe on v7x (64 MiB physical VMEM).
        need = 4 * block_bytes + weight_bytes + (2 << 20)
        vmem_limit_bytes = min(max(need, 32 << 20), 64 << 20)
        # TODO(synk): feature maps too large for this budget need an extra
        # spatial-tile grid axis with a two-phase pool-then-gate structure.

    cost = pl.CostEstimate(
        flops=2 * N * HW * C + 4 * N * C * Cr,          # pool + gate + two tiny FCs
        transcendentals=N * C,                          # sigmoid
        bytes_accessed=2 * N * HW * C * itemsize + weight_bytes,
    )

    out_hwc = pl.pallas_call(
        _se_kernel,
        out_shape=jax.ShapeDtypeStruct((N, HW, C), x.dtype),
        grid_spec=pltpu.PrefetchScalarGridSpec(
            num_scalar_prefetch=0,
            grid=(N,),
            in_specs=[
                # squeeze the size-1 batch dim -> kernel sees a clean 2-D (HW, C) ref
                pl.BlockSpec((pl.Squeezed(), HW, C), lambda n: (n, 0, 0)),
                # weights/biases: constant index_map -> fetched once, revisited
                pl.BlockSpec((Cr, C), lambda n: (0, 0)),
                pl.BlockSpec((Cr, 1), lambda n: (0, 0)),
                pl.BlockSpec((Cr, C), lambda n: (0, 0)),
                pl.BlockSpec((1, C), lambda n: (0, 0)),
            ],
            out_specs=pl.BlockSpec((pl.Squeezed(), HW, C), lambda n: (n, 0, 0)),
        ),
        compiler_params=pltpu.CompilerParams(
            dimension_semantics=("parallel",),          # batch axis sharded on v7x megacore
            vmem_limit_bytes=vmem_limit_bytes,
        ),
        cost_estimate=cost,
    )(x_hwc, w1_f, b1_r, w2t, b2_r)

    return jnp.transpose(out_hwc, (0, 2, 1)).reshape(N, C, H, W)


def _reference(x, w1, b1, w2, b2):
    """Pure-JAX reference of the intended SE forward pass."""
    Cr = w1.shape[0]
    C = w2.shape[0]
    pooled = jnp.mean(x, axis=(2, 3))                          # (N, C)
    h = jnp.maximum(pooled @ w1.reshape(Cr, C).T + b1, 0.0)    # (N, Cr)
    s = jax.nn.sigmoid(h @ w2.reshape(C, Cr).T + b2)           # (N, C)
    return x * s[:, :, None, None]


if __name__ == "__main__":
    # Small but SE-realistic shapes: C=128 is lane-dense, HW=49 is the exact
    # misaligned spatial size the channels-last layout is designed for.
    N, C, H, W = 2, 128, 7, 7
    ratio = 8
    Cr = C // ratio

    key = jax.random.PRNGKey(0)
    kx, kw1, kb1, kw2, kb2 = jax.random.split(key, 5)

    x = jax.random.normal(kx, (N, C, H, W), dtype=jnp.float32)
    # Conv2d(C, C//r, 1): weight (Cr, C, 1, 1), bias (Cr,)
    w1 = jax.random.normal(kw1, (Cr, C, 1, 1), dtype=jnp.float32) * 0.1
    b1 = jax.random.normal(kb1, (Cr,), dtype=jnp.float32) * 0.1
    # Excite conv (C//r -> C): weight (C, Cr, 1, 1), bias (C,)
    w2 = jax.random.normal(kw2, (C, Cr, 1, 1), dtype=jnp.float32) * 0.1
    b2 = jax.random.normal(kb2, (C,), dtype=jnp.float32) * 0.1

    # f32 path
    out = jax.block_until_ready(squeeze_and_excite(x, w1, b1, w2, b2))
    ref = _reference(x, w1, b1, w2, b2)
    assert out.shape == (N, C, H, W)
    assert jnp.allclose(out, ref, atol=1e-5, rtol=1e-5), "f32 mismatch vs reference"

    # bf16 I/O path (halves HBM traffic; gate math stays in f32 in-kernel)
    x_bf = x.astype(jnp.bfloat16)
    out_bf = jax.block_until_ready(squeeze_and_excite(x_bf, w1, b1, w2, b2))
    assert out_bf.dtype == jnp.bfloat16
    ref_bf = _reference(x_bf.astype(jnp.float32), w1, b1, w2, b2)
    assert jnp.allclose(out_bf.astype(jnp.float32), ref_bf, atol=3e-2, rtol=3e-2), \
        "bf16 mismatch vs reference"

    print("KERNEL_OK")
</pallas_src>

<mosaic_0001>
module attributes {stable_mosaic.version = 11 : i64} {
  func.func @_se_kernel(%arg0: i32, %arg1: memref<1x49x128xf32, #tpu.memory_space<vmem>>, %arg2: memref<16x128xf32, #tpu.memory_space<vmem>>, %arg3: memref<16x1xf32, #tpu.memory_space<vmem>>, %arg4: memref<16x128xf32, #tpu.memory_space<vmem>>, %arg5: memref<1x128xf32, #tpu.memory_space<vmem>>, %arg6: memref<1x49x128xf32, #tpu.memory_space<vmem>>) attributes {dimension_semantics = [#tpu.dimension_semantics<parallel>], iteration_bounds = array<i64: 2>, scalar_prefetch = 0 : i64, scratch_operands = 0 : i64, tpu.core_type = #tpu.core_type<tc>, window_params = [{transform_indices = @transform_0, window_bounds = array<i64: 1, 49, 128>}, {pipeline_mode = #tpu.pipeline_mode<synchronous>, transform_indices = @transform_1, window_bounds = array<i64: 16, 128>}, {pipeline_mode = #tpu.pipeline_mode<synchronous>, transform_indices = @transform_2, window_bounds = array<i64: 16, 1>}, {pipeline_mode = #tpu.pipeline_mode<synchronous>, transform_indices = @transform_3, window_bounds = array<i64: 16, 128>}, {pipeline_mode = #tpu.pipeline_mode<synchronous>, transform_indices = @transform_4, window_bounds = array<i64: 1, 128>}, {transform_indices = @transform_5, window_bounds = array<i64: 1, 49, 128>}]} {
    %c0 = arith.constant 0 : index
    %c0_0 = arith.constant 0 : index
    %c0_1 = arith.constant 0 : index
    %0 = vector.load %arg1[%c0, %c0_0, %c0_1] : memref<1x49x128xf32, #tpu.memory_space<vmem>>, vector<1x49x128xf32>
    %1 = vector.shape_cast %0 : vector<1x49x128xf32> to vector<49x128xf32>
    %cst = arith.constant dense<0.000000e+00> : vector<128xf32>
    %2 = vector.multi_reduction <add>, %1, %cst [0] : vector<49x128xf32> to vector<128xf32>
    %3 = vector.shape_cast %2 : vector<128xf32> to vector<1x128xf32>
    %cst_2 = arith.constant 4.900000e+01 : f32
    %4 = vector.broadcast %cst_2 : f32 to vector<1x128xf32>
    %5 = arith.divf %3, %4 : vector<1x128xf32>
    %c0_3 = arith.constant 0 : index
    %c0_4 = arith.constant 0 : index
    %6 = vector.load %arg2[%c0_3, %c0_4] : memref<16x128xf32, #tpu.memory_space<vmem>>, vector<16x128xf32>
    %7 = vector.broadcast %5 : vector<1x128xf32> to vector<16x128xf32>
    %8 = arith.mulf %6, %7 : vector<16x128xf32>
    %cst_5 = arith.constant dense<0.000000e+00> : vector<16xf32>
    %9 = vector.multi_reduction <add>, %8, %cst_5 [1] : vector<16x128xf32> to vector<16xf32>
    %10 = vector.shape_cast %9 : vector<16xf32> to vector<16x1xf32>
    %c0_6 = arith.constant 0 : index
    %c0_7 = arith.constant 0 : index
    %11 = vector.load %arg3[%c0_6, %c0_7] : memref<16x1xf32, #tpu.memory_space<vmem>>, vector<16x1xf32>
    %12 = arith.addf %10, %11 : vector<16x1xf32>
    %cst_8 = arith.constant 0.000000e+00 : f32
    %13 = vector.broadcast %cst_8 : f32 to vector<16x1xf32>
    %14 = arith.maximumf %12, %13 : vector<16x1xf32>
    %c0_9 = arith.constant 0 : index
    %c0_10 = arith.constant 0 : index
    %15 = vector.load %arg4[%c0_9, %c0_10] : memref<16x128xf32, #tpu.memory_space<vmem>>, vector<16x128xf32>
    %16 = vector.broadcast %14 : vector<16x1xf32> to vector<16x128xf32>
    %17 = arith.mulf %15, %16 : vector<16x128xf32>
    %cst_11 = arith.constant dense<0.000000e+00> : vector<128xf32>
    %18 = vector.multi_reduction <add>, %17, %cst_11 [0] : vector<16x128xf32> to vector<128xf32>
    %19 = vector.shape_cast %18 : vector<128xf32> to vector<1x128xf32>
    %c0_12 = arith.constant 0 : index
    %c0_13 = arith.constant 0 : index
    %20 = vector.load %arg5[%c0_12, %c0_13] : memref<1x128xf32, #tpu.memory_space<vmem>>, vector<1x128xf32>
    %21 = arith.addf %19, %20 : vector<1x128xf32>
    %22 = arith.negf %21 : vector<1x128xf32>
    %23 = math.exp %22 : vector<1x128xf32>
    %cst_14 = arith.constant 1.000000e+00 : f32
    %24 = vector.broadcast %cst_14 : f32 to vector<1x128xf32>
    %25 = arith.addf %24, %23 : vector<1x128xf32>
    %26 = arith.divf %24, %25 : vector<1x128xf32>
    %27 = vector.broadcast %26 : vector<1x128xf32> to vector<49x128xf32>
    %28 = arith.mulf %1, %27 : vector<49x128xf32>
    %c0_15 = arith.constant 0 : index
    %c0_16 = arith.constant 0 : index
    %c0_17 = arith.constant 0 : index
    %29 = vector.load %arg6[%c0_15, %c0_16, %c0_17] : memref<1x49x128xf32, #tpu.memory_space<vmem>>, vector<1x49x128xf32>
    %30 = vector.shape_cast %29 : vector<1x49x128xf32> to vector<49x128xf32>
    %31 = vector.shape_cast %28 : vector<49x128xf32> to vector<1x49x128xf32>
    tpu.vector_store %arg6[%c0_15, %c0_16, %c0_17], %31 {strides = array<i32>} : memref<1x49x128xf32, #tpu.memory_space<vmem>>, vector<1x49x128xf32>,
    return
  }
  func.func @transform_0(%arg0: i32) -> (i32, i32, i32) {
    %c0_i32 = arith.constant 0 : i32
    %c0_i32_0 = arith.constant 0 : i32
    %c0_i32_1 = arith.constant 0 : i32
    return %arg0, %c0_i32, %c0_i32_0 : i32, i32, i32
  }
  func.func @transform_1(%arg0: i32) -> (i32, i32) {
    %c0_i32 = arith.constant 0 : i32
    %c0_i32_0 = arith.constant 0 : i32
    %c0_i32_1 = arith.constant 0 : i32
    return %c0_i32, %c0_i32_0 : i32, i32
  }
  func.func @transform_2(%arg0: i32) -> (i32, i32) {
    %c0_i32 = arith.constant 0 : i32
    %c0_i32_0 = arith.constant 0 : i32
    %c0_i32_1 = arith.constant 0 : i32
    return %c0_i32, %c0_i32_0 : i32, i32
  }
  func.func @transform_3(%arg0: i32) -> (i32, i32) {
    %c0_i32 = arith.constant 0 : i32
    %c0_i32_0 = arith.constant 0 : i32
    %c0_i32_1 = arith.constant 0 : i32
    return %c0_i32, %c0_i32_0 : i32, i32
  }
  func.func @transform_4(%arg0: i32) -> (i32, i32) {
    %c0_i32 = arith.constant 0 : i32
    %c0_i32_0 = arith.constant 0 : i32
    %c0_i32_1 = arith.constant 0 : i32
    return %c0_i32, %c0_i32_0 : i32, i32
  }
  func.func @transform_5(%arg0: i32) -> (i32, i32, i32) {
    %c0_i32 = arith.constant 0 : i32
    %c0_i32_0 = arith.constant 0 : i32
    %c0_i32_1 = arith.constant 0 : i32
    return %arg0, %c0_i32, %c0_i32_0 : i32, i32, i32
  }
}

</mosaic_0001>

<llo_original>
// kernel: tpu_custom_call.1
$region0: #{tpu_custom_call.1}
  #allocation0 [shape = 'u32[]', space=smem, size = 0x4, offset = 0x4, fixed_abs, tag = 'smem constant byte address 0x4 - core index']
  #allocation1 [shape = 'u32[144,128]{1,0:T(1,128)}', space=vmem, size = 0x12000, scoped, tag = 'internal scratch']
  %s0 = inlined_call_operand.vmem [shape: f32[2,49,128], index: 0, kind: input, shape index: {}]
  %s1 = inlined_call_operand.vmem [shape: f32[16,128], index: 1, kind: input, shape index: {}]
  %s2 = inlined_call_operand.vmem [shape: f32[16,1], index: 2, kind: input, shape index: {}]
  %s3 = inlined_call_operand.vmem [shape: f32[16,128], index: 3, kind: input, shape index: {}]
  %s4 = inlined_call_operand.vmem [shape: f32[1,128], index: 4, kind: input, shape index: {}]
  %s5 = inlined_call_operand.vmem [shape: f32[2,49,128], index: 5, kind: output, shape index: {}]
  %s6 = sld [smem:[#allocation0]]
  $region53: #{tpu_custom_call.1} parent=0
    _
  %s8 = ssub.s32 1, %s6
  %s9 = scalar_select 0, %s8, %s6
  loop: start=0, step=1, limit=4
  $region2: #{tpu_custom_call.1} parent=0 // loop_pre_header
    _
  $region3: #{tpu_custom_call.1} parent=0 // loop_header
    %s11 = sphi 0, %s15
    %p12 = scmp.ge.s32.totalorder %s11, 4
    %s21 = sphi 0, %s23
    %s24 = sphi 0, %s21
    %s25 = sphi 0, %s24
    %s41 = sphi 0, %s25
    %s45 = sphi 0, %s45
    %s47 = sphi 0, %s45
    %s48 = sphi 0, %s47
    %s62 = sphi 0, %s48
    %s66 = sphi 0, %s66
    %s68 = sphi 0, %s66
    %s69 = sphi 0, %s68
    %s83 = sphi 0, %s69
    %s87 = sphi 0, %s87
    %s89 = sphi 0, %s87
    %s90 = sphi 0, %s89
    %s104 = sphi 0, %s90
    %s108 = sphi 0, %s108
    %s110 = sphi 0, %s108
    %s111 = sphi 0, %s110
    %s125 = sphi 0, %s111
    %s131 = sphi 0, %s133
    %s134 = sphi 0, %s131
    %s135 = sphi 0, %s134
    %s151 = sphi 0, %s135
  $region4: #{tpu_custom_call.1} parent=0 // loop_header_branch
    %14 = sbr.rel (%p12) target = $region8
  $region5: #{tpu_custom_call.1} parent=0 // loop_body
    %s16 = ssub.s32 %s11, 1
    %s17 = ssub.s32 %s11, 2
    %s18 = sadd.s32 %s11, 1
    %s19 = ssub.s32 %s11, %s18
    %p20 = scmp.eq.s32.totalorder %s19, 0
    %s22 = sadd.s32 %s21, 1
    %s23 = scalar_select %p20, %s21, %s22
    %p26 = pneg %p20
    %p27 = scmp.eq.s32.totalorder %s11, 1
    %p28 = por %p26, %p27
    %p29 = scmp.ne.s32.totalorder %s21, %s24
    %p30 = scmp.eq.s32.totalorder %s11, 0
    %p31 = por %p29, %p30
    %p32 = scmp.ne.s32.totalorder %s21, %s24
    %p33 = scmp.eq.s32.totalorder %s16, 1
    %p34 = por %p32, %p33
    %p35 = scmp.ne.s32.totalorder %s24, %s25
    %p36 = scmp.eq.s32.totalorder %s16, 0
    %p37 = por %p35, %p36
    %p38 = scmp.ne.s32.totalorder %s24, %s25
    %p39 = scmp.eq.s32.totalorder %s17, 1
    %p40 = por %p38, %p39
    %p42 = scmp.ne.s32.totalorder %s25, %s41
    %p43 = scmp.eq.s32.totalorder %s17, 0
    %p44 = por %p42, %p43
    %s46 = sadd.s32 %s45, 1
    %p49 = scmp.eq.s32.totalorder %s11, 1
    %p50 = scmp.ne.s32.totalorder %s45, %s47
    %p51 = scmp.eq.s32.totalorder %s11, 0
    %p52 = por %p50, %p51
    %p53 = scmp.ne.s32.totalorder %s45, %s47
    %p54 = scmp.eq.s32.totalorder %s16, 1
    %p55 = por %p53, %p54
    %p56 = scmp.ne.s32.totalorder %s47, %s48
    %p57 = scmp.eq.s32.totalorder %s16, 0
    %p58 = por %p56, %p57
    %p59 = scmp.ne.s32.totalorder %s47, %s48
    %p60 = scmp.eq.s32.totalorder %s17, 1
    %p61 = por %p59, %p60
    %p63 = scmp.ne.s32.totalorder %s48, %s62
    %p64 = scmp.eq.s32.totalorder %s17, 0
    %p65 = por %p63, %p64
    %s67 = sadd.s32 %s66, 1
    %p70 = scmp.eq.s32.totalorder %s11, 1
    %p71 = scmp.ne.s32.totalorder %s66, %s68
    %p72 = scmp.eq.s32.totalorder %s11, 0
    %p73 = por %p71, %p72
    %p74 = scmp.ne.s32.totalorder %s66, %s68
    %p75 = scmp.eq.s32.totalorder %s16, 1
    %p76 = por %p74, %p75
    %p77 = scmp.ne.s32.totalorder %s68, %s69
    %p78 = scmp.eq.s32.totalorder %s16, 0
    %p79 = por %p77, %p78
    %p80 = scmp.ne.s32.totalorder %s68, %s69
    %p81 = scmp.eq.s32.totalorder %s17, 1
    %p82 = por %p80, %p81
    %p84 = scmp.ne.s32.totalorder %s69, %s83
    %p85 = scmp.eq.s32.totalorder %s17, 0
    %p86 = por %p84, %p85
    %s88 = sadd.s32 %s87, 1
    %p91 = scmp.eq.s32.totalorder %s11, 1
    %p92 = scmp.ne.s32.totalorder %s87, %s89
    %p93 = scmp.eq.s32.totalorder %s11, 0
    %p94 = por %p92, %p93
    %p95 = scmp.ne.s32.totalorder %s87, %s89
    %p96 = scmp.eq.s32.totalorder %s16, 1
    %p97 = por %p95, %p96
    %p98 = scmp.ne.s32.totalorder %s89, %s90
    %p99 = scmp.eq.s32.totalorder %s16, 0
    %p100 = por %p98, %p99
    %p101 = scmp.ne.s32.totalorder %s89, %s90
    %p102 = scmp.eq.s32.totalorder %s17, 1
    %p103 = por %p101, %p102
    %p105 = scmp.ne.s32.totalorder %s90, %s104
    %p106 = scmp.eq.s32.totalorder %s17, 0
    %p107 = por %p105, %p106
    %s109 = sadd.s32 %s108, 1
    %p112 = scmp.eq.s32.totalorder %s11, 1
    %p113 = scmp.ne.s32.totalorder %s108, %s110
    %p114 = scmp.eq.s32.totalorder %s11, 0
    %p115 = por %p113, %p114
    %p116 = scmp.ne.s32.totalorder %s108, %s110
    %p117 = scmp.eq.s32.totalorder %s16, 1
    %p118 = por %p116, %p117
    %p119 = scmp.ne.s32.totalorder %s110, %s111
    %p120 = scmp.eq.s32.totalorder %s16, 0
    %p121 = por %p119, %p120
    %p122 = scmp.ne.s32.totalorder %s110, %s111
    %p123 = scmp.eq.s32.totalorder %s17, 1
    %p124 = por %p122, %p123
    %p126 = scmp.ne.s32.totalorder %s111, %s125
    %p127 = scmp.eq.s32.totalorder %s17, 0
    %p128 = por %p126, %p127
    %s129 = ssub.s32 %s11, %s18
    %p130 = scmp.eq.s32.totalorder %s129, 0
    %s132 = sadd.s32 %s131, 1
    %s133 = scalar_select %p130, %s131, %s132
    %p136 = pneg %p130
    %p137 = scmp.eq.s32.totalorder %s11, 1
    %p138 = por %p136, %p137
    %p139 = scmp.ne.s32.totalorder %s131, %s134
    %p140 = scmp.eq.s32.totalorder %s11, 0
    %p141 = por %p139, %p140
    %p142 = scmp.ne.s32.totalorder %s131, %s134
    %p143 = scmp.eq.s32.totalorder %s16, 1
    %p144 = por %p142, %p143
    %p145 = scmp.ne.s32.totalorder %s134, %s135
    %p146 = scmp.eq.s32.totalorder %s16, 0
    %p147 = por %p145, %p146
    %p148 = scmp.ne.s32.totalorder %s134, %s135
    %p149 = scmp.eq.s32.totalorder %s17, 1
    %p150 = por %p148, %p149
    %p152 = scmp.ne.s32.totalorder %s135, %s151
    %p153 = scmp.eq.s32.totalorder %s17, 0
    %p154 = por %p152, %p153
    %p155 = scmp.le.s32.totalorder 1, %s11
    %p156 = scmp.lt.s32.totalorder %s11, 3
    %p157 = pnand %p155, %p156
    %p158 = pneg %p157
    // Predicated region
    $region9: #{tpu_custom_call.1} parent=5 // pred_check
      _
    $region10: #{tpu_custom_call.1} parent=5 // pred_check_branch
      %160 = sbr.rel (%p157) target = $region12
    $region11: #{tpu_custom_call.1} parent=5 // pred_region
      %s161 = ssub.s32 %s11, 1
      // Predicated region
      $region13: #{tpu_custom_call.1} parent=11 // pred_check
        %p162 = pneg %p58
      $region14: #{tpu_custom_call.1} parent=11 // pred_check_branch
        %164 = sbr.rel (%p162) target = $region16
      $region15: #{tpu_custom_call.1} parent=11 // pred_region
        _
      $region16: #{tpu_custom_call.1} parent=11 // pred_fallthru
        _
      // Predicated region
      $region17: #{tpu_custom_call.1} parent=11 // pred_check
        %p165 = pneg %p79
      $region18: #{tpu_custom_call.1} parent=11 // pred_check_branch
        %167 = sbr.rel (%p165) target = $region20
      $region19: #{tpu_custom_call.1} parent=11 // pred_region
        _
      $region20: #{tpu_custom_call.1} parent=11 // pred_fallthru
        _
      // Predicated region
      $region21: #{tpu_custom_call.1} parent=11 // pred_check
        %p168 = pneg %p100
      $region22: #{tpu_custom_call.1} parent=11 // pred_check_branch
        %170 = sbr.rel (%p168) target = $region24
      $region23: #{tpu_custom_call.1} parent=11 // pred_region
        _
      $region24: #{tpu_custom_call.1} parent=11 // pred_fallthru
        _
      // Predicated region
      $region25: #{tpu_custom_call.1} parent=11 // pred_check
        %p171 = pneg %p121
      $region26: #{tpu_custom_call.1} parent=11 // pred_check_branch
        %173 = sbr.rel (%p171) target = $region28
      $region27: #{tpu_custom_call.1} parent=11 // pred_region
        _
      $region28: #{tpu_custom_call.1} parent=11 // pred_fallthru
        _
    $region12: #{tpu_custom_call.1} parent=5 // pred_fallthru
      _
    %p174 = scmp.lt.s32.totalorder %s11, 2
    // Predicated region
    $region29: #{tpu_custom_call.1} parent=5 // pred_check
      %p175 = pneg %p174
    $region30: #{tpu_custom_call.1} parent=5 // pred_check_branch
      %177 = sbr.rel (%p175) target = $region32
    $region31: #{tpu_custom_call.1} parent=5 // pred_region
      // Predicated region
      $region33: #{tpu_custom_call.1} parent=31 // pred_check
        %p178 = pneg %p31
      $region34: #{tpu_custom_call.1} parent=31 // pred_check_branch
        %180 = sbr.rel (%p178) target = $region36
      $region35: #{tpu_custom_call.1} parent=31 // pred_region
        %p181 = scmp.lt.s32.totalorder %s11, 1
        %s182 = scalar_select %p181, %s11, 1
        %s183 = smul.addr %s182, 7
        %s184 = smul.addr %s183, 8
        %s185 = scalar_lea.vmem %s0, %s184
      $region36: #{tpu_custom_call.1} parent=31 // pred_fallthru
        _
    $region32: #{tpu_custom_call.1} parent=5 // pred_fallthru
      _
    %p186 = scmp.le.s32.totalorder 1, %s11
    %p187 = scmp.lt.s32.totalorder %s11, 3
    %p188 = pnand %p186, %p187
    %p189 = pneg %p188
    // Predicated region
    $region37: #{tpu_custom_call.1} parent=5 // pred_check
      _
    $region38: #{tpu_custom_call.1} parent=5 // pred_check_branch
      %191 = sbr.rel (%p188) target = $region40
    $region39: #{tpu_custom_call.1} parent=5 // pred_region
      %s192 = ssub.s32 %s11, 1
      %p193 = scmp.lt.s32.totalorder %s16, 1
      %s194 = scalar_select %p193, %s16, 1
      %s195 = smul.addr %s194, 7
      %s196 = smul.addr %s195, 8
      %s197 = scalar_lea.vmem %s0, %s196
      %p198 = pneg %p37
      %p199 = pneg %p34
      %p200 = pneg %p58
      %p201 = pneg %p55
      %p202 = pneg %p79
      %p203 = pneg %p76
      %p204 = pneg %p100
      %p205 = pneg %p97
      %p206 = pneg %p121
      %p207 = pneg %p118
      %p208 = pneg %p147
      %p209 = pneg %p144
      %p210 = scmp.lt.s32.totalorder %s16, 1
      %s211 = scalar_select %p210, %s16, 1
      %s212 = smul.addr %s211, 7
      %s213 = smul.addr %s212, 8
      %s214 = scalar_lea.vmem %s5, %s213
      %p215 = scmp.lt.s32.totalorder %s16, 1
      %s216 = scalar_select %p215, %s16, 1
      %s217 = smul.addr %s216, 7
      %s218 = smul.addr %s217, 8
      %s219 = scalar_lea.vmem %s0, %s218
      %p220 = scmp.lt.s32.totalorder %s16, 1
      %s221 = scalar_select %p220, %s16, 1
      %s222 = smul.addr %s221, 7
      %s223 = smul.addr %s222, 8
      %s224 = scalar_lea.vmem %s5, %s223
      %v225 = vld [vmem:[%s219] sm:$0xff]
      %v226 = vld [vmem:[%s219 + $0x8] sm:$0xff]
      %v227 = vld [vmem:[%s219 + $0x10] sm:$0xff]
      %v228 = vld [vmem:[%s219 + $0x18] sm:$0xff]
      %v229 = vld [vmem:[%s219 + $0x20] sm:$0xff]
      %v230 = vld [vmem:[%s219 + $0x28] sm:$0xff]
      %v231 = vld [vmem:[%s219 + $0x30] sm:$0x1]
      %v232 = vadd.f32 %v225, %v226
      %v233 = vadd.f32 %v232, %v227
      %v234 = vadd.f32 %v233, %v228
      %v235 = vadd.f32 %v234, %v229
      %v236 = vadd.f32 %v235, %v230
      %vm237 = vcmask 1040384
      %v238 = vsel %vm237, %v231, 0.0
      %v239 = vadd.f32 %v236, %v238
      %v240 = vrot.slane %v239, 4
      %v241 = vadd.f32 %v239, %v240
      %v242 = vrot.slane %v241, 2
      %v243 = vadd.f32 %v241, %v242
      %v244 = vrot.slane %v243, 1
      %v245 = vadd.f32 %v243, %v244
      %v246 = vrcp.pop 49.0
      %v247 = vmul.f32 %v245, %v246
      %v248 = vld [vmem:[%s1] sm:$0xff]
      %v249 = vld [vmem:[%s1 + $0x8] sm:$0xff]
      %v250 = vmul.f32 %v248, %v247
      %v251 = vmul.f32 %v249, %v247
      %252 = vadd.xlane.f32.xlu0 %v250
      %v253 = vpop.xlane.xlu0 %252
      %254 = vadd.xlane.f32.xlu0 %v251
      %v255 = vpop.xlane.xlu0 %254
      %v256 = vld [vmem:[%s2] sm:$0xff]
      %v257 = vld [vmem:[%s2 + $0x8] sm:$0xff]
      %v258 = vadd.f32 %v253, %v256
      %v259 = vadd.f32 %v255, %v257
      %v260 = vmax.f32 %v258, 0.0
      %v261 = vmax.f32 %v259, 0.0
      %v262 = vld [vmem:[%s3] sm:$0xff]
      %v263 = vld [vmem:[%s3 + $0x8] sm:$0xff]
      %265 = vset.pattern.permute.xlu0 0
      %266 = vperm.xlu0 %265, %v260
      %v267 = vpop.permute.xlu0 %266
      %270 = vset.pattern.permute.xlu0 0
      %271 = vperm.xlu0 %270, %v261
      %v272 = vpop.permute.xlu0 %271
      %v274 = vmul.f32 %v262, %v267
      %v275 = vmul.f32 %v263, %v272
      %v276 = vadd.f32 %v274, %v275
      %v277 = vrot.slane %v276, 4
      %v278 = vadd.f32 %v276, %v277
      %v279 = vrot.slane %v278, 2
      %v280 = vadd.f32 %v278, %v279
      %v281 = vrot.slane %v280, 1
      %v282 = vadd.f32 %v280, %v281
      %v283 = vld [vmem:[%s4] sm:$0x1]
      %v284 = vadd.f32 %v282, %v283
      %v285 = vxor.u32 %v284, 2147483648
      %v286 = vmul.f32 %v285, 1.442695
      %v287 = vpow.pop %v286
      %v288 = vadd.f32 %v287, 1.0
      %v289 = vrcp.pop %v288
      %v290 = vmul.f32 1.0, %v289
      %v291 = vlaneseq
      %v292 = vshrl.u32 %v291, 7
      %v293 = vsub.s32 0, %v292
      %v294 = vrot.slane %v290, %v293
      %v295 = vmul.f32 %v225, %v294
      %v296 = vmul.f32 %v226, %v294
      %v297 = vmul.f32 %v227, %v294
      %v298 = vmul.f32 %v228, %v294
      %v299 = vmul.f32 %v229, %v294
      %v300 = vmul.f32 %v230, %v294
      %v301 = vmul.f32 %v231, %v294
      %302 = vst [vmem:[%s224] sm:$0xff] %v295
      %303 = vst [vmem:[%s224 + $0x8] sm:$0xff] %v296
      %304 = vst [vmem:[%s224 + $0x10] sm:$0xff] %v297
      %305 = vst [vmem:[%s224 + $0x18] sm:$0xff] %v298
      %306 = vst [vmem:[%s224 + $0x20] sm:$0xff] %v299
      %307 = vst [vmem:[%s224 + $0x28] sm:$0xff] %v300
      %308 = vst [vmem:[%s224 + $0x30] sm:$0x1] %v301
      %p309 = scmp.lt.s32.totalorder %s16, 1
      %s310 = scalar_select %p309, %s16, 1
      %s311 = smul.addr %s310, 7
      %s312 = smul.addr %s311, 8
      %s313 = scalar_lea.vmem %s5, %s312
      // Predicated region
      $region41: #{tpu_custom_call.1} parent=39 // pred_check
        %p314 = pneg %p144
      $region42: #{tpu_custom_call.1} parent=39 // pred_check_branch
        %316 = sbr.rel (%p314) target = $region44
      $region43: #{tpu_custom_call.1} parent=39 // pred_region
        _
      $region44: #{tpu_custom_call.1} parent=39 // pred_fallthru
        _
    $region40: #{tpu_custom_call.1} parent=5 // pred_fallthru
      _
    %p317 = scmp.le.s32.totalorder 2, %s11
    // Predicated region
    $region45: #{tpu_custom_call.1} parent=5 // pred_check
      %p318 = pneg %p317
    $region46: #{tpu_custom_call.1} parent=5 // pred_check_branch
      %320 = sbr.rel (%p318) target = $region48
    $region47: #{tpu_custom_call.1} parent=5 // pred_region
      %s321 = ssub.s32 %s11, 2
      // Predicated region
      $region49: #{tpu_custom_call.1} parent=47 // pred_check
        %p322 = pneg %p150
      $region50: #{tpu_custom_call.1} parent=47 // pred_check_branch
        %324 = sbr.rel (%p322) target = $region52
      $region51: #{tpu_custom_call.1} parent=47 // pred_region
        %p325 = scmp.lt.s32.totalorder %s17, 1
        %s326 = scalar_select %p325, %s17, 1
        %s327 = smul.addr %s326, 7
        %s328 = smul.addr %s327, 8
        %s329 = scalar_lea.vmem %s5, %s328
      $region52: #{tpu_custom_call.1} parent=47 // pred_fallthru
        _
    $region48: #{tpu_custom_call.1} parent=5 // pred_fallthru
      _
  $region6: #{tpu_custom_call.1} parent=0 // loop_footer
    %s15 = sadd.s32 1, %s11
  $region7: #{tpu_custom_call.1} parent=0 // loop_footer_branch
    %10 = sbr.rel target = $region3
  $region8: #{tpu_custom_call.1} parent=0 // loop_exit
    _

</llo_original>
